<compile_context>
chip_gen: v6e
topology: v6e:2x2x1
jax: 0.10.0
libtpu: 0.0.40
codegen_flags: <defaults>
</compile_context>

<pallas_src>
import jax
import jax.numpy as jnp
from jax.experimental import pallas as pl
from jax.experimental.pallas import tpu as pltpu

IN_F = 60
HID_F = 30
OUT_F = 8

# Fixed batch tile (rows).  See VMEM accounting in the header comment.
_BATCH_TILE = 2048

# Below this many rows, skip pallas_call entirely (launch-latency bound).
_SMALL_BATCH_FALLBACK = 1024


def _round_up(n, m):
    return ((n + m - 1) // m) * m


def _mlp_kernel(x_ref, w1_ref, b1_ref, w2_ref, b2_ref, o_ref):
    # x_ref: [TB, 60], w1_ref: [60, 30], b1_ref: [1, 30],
    # w2_ref: [30, 8],  b2_ref: [1, 8],  o_ref: [TB, 8]
    x = x_ref[...]

    # Linear(60, 30) + ReLU.  Operands stay in their native dtype (bf16 stays
    # bf16 on the MXU); accumulation is f32 via preferred_element_type.
    h = jnp.dot(x, w1_ref[...], preferred_element_type=jnp.float32)
    h = h + b1_ref[...].astype(jnp.float32)
    h = jnp.maximum(h, 0.0)

    # Dropout(): identity in eval mode (inference semantics).
    # TODO(synk): training-mode dropout (Bernoulli mask * 1/(1-p)) would use
    # pltpu.prng_seed + pltpu.stateful_bernoulli; omitted for eval forward.

    # Linear(30, 8).  Cast h back to the compute dtype so a bf16 model keeps
    # the native-bf16 MXU path instead of an emulated f32 matmul.
    logits = jnp.dot(h.astype(x.dtype), w2_ref[...],
                     preferred_element_type=jnp.float32)
    logits = logits + b2_ref[...].astype(jnp.float32)
    o_ref[...] = logits.astype(o_ref.dtype)


def _forward_jnp(x_flat, w1, b1, w2, b2):
    """Plain-JAX forward for small batches (same math as the kernel)."""
    h = jnp.dot(x_flat, w1, preferred_element_type=jnp.float32)
    h = jnp.maximum(h + b1.astype(jnp.float32), 0.0)
    out = jnp.dot(h.astype(x_flat.dtype), w2, preferred_element_type=jnp.float32)
    out = out + b2.astype(jnp.float32)
    return out.astype(w1.dtype)


def gesture_forward(x, w1, b1, w2, b2, *,
                    batch_tile=_BATCH_TILE,
                    min_pallas_batch=_SMALL_BATCH_FALLBACK):
    """Forward pass of GestureNeuralNetwork.

    x : [B, ...] flattening to 60 features, or a single [60] vector.
    w1: [60, 30] (transposed vs PyTorch), b1: [30]
    w2: [30, 8]  (transposed vs PyTorch), b2: [8]
    Returns [B, 8] (or [8] for a 1-D input).
    """
    was_1d = x.ndim == 1
    if was_1d:
        x = x.reshape(1, -1)           # single sample -> batch of 1
    else:
        x = x.reshape(x.shape[0], -1)  # torch.flatten(x, 1)

    # x = x.to(weight.dtype)  (module semantics, not an added perf cast)
    x = x.astype(w1.dtype)

    B = x.shape[0]

    # Small-batch fallback: one grid step would be pure launch + DMA latency.
    if B < min_pallas_batch:
        out = _forward_jnp(x, w1, b1, w2, b2)
        return out[0] if was_1d else out

    # Fixed moderate tile (not derived from B) so large batches get many
    # pipelined grid steps; capped at round_up(B, 8) so forced small batches
    # do not pad all the way to a full tile.
    tb = min(_round_up(max(batch_tile, 8), 8), _round_up(B, 8))
    b_pad = _round_up(B, tb)
    if b_pad != B:
        x = jnp.pad(x, ((0, b_pad - B), (0, 0)))

    b1_2d = b1.reshape(1, HID_F)
    b2_2d = b2.reshape(1, OUT_F)

    out = pl.pallas_call(
        _mlp_kernel,
        out_shape=jax.ShapeDtypeStruct((b_pad, OUT_F), w1.dtype),
        grid_spec=pltpu.PrefetchScalarGridSpec(
            num_scalar_prefetch=0,
            grid=(b_pad // tb,),
            in_specs=[
                pl.BlockSpec((tb, IN_F), lambda i: (i, 0)),      # x tile marches
                pl.BlockSpec((IN_F, HID_F), lambda i: (0, 0)),   # weights resident
                pl.BlockSpec((1, HID_F), lambda i: (0, 0)),
                pl.BlockSpec((HID_F, OUT_F), lambda i: (0, 0)),
                pl.BlockSpec((1, OUT_F), lambda i: (0, 0)),
            ],
            out_specs=pl.BlockSpec((tb, OUT_F), lambda i: (i, 0)),
        ),
        compiler_params=pltpu.CompilerParams(
            # Batch tiles are independent -> parallel (megacore sharding on v7x).
            dimension_semantics=("parallel",),
        ),
    )(x, w1, b1_2d, w2, b2_2d)

    out = out[:B]
    if was_1d:
        out = out[0]
    return out


def init_params(key, dtype=jnp.float32):
    """Deterministic init matching PyTorch nn.Linear default:
    U(-1/sqrt(fan_in), 1/sqrt(fan_in)) for both weight and bias."""
    k1, k2, k3, k4 = jax.random.split(key, 4)
    bound1 = 1.0 / (IN_F ** 0.5)
    bound2 = 1.0 / (HID_F ** 0.5)
    # Stored transposed relative to PyTorch's (out, in) layout.
    w1 = jax.random.uniform(k1, (IN_F, HID_F), dtype, -bound1, bound1)
    b1 = jax.random.uniform(k2, (HID_F,), dtype, -bound1, bound1)
    w2 = jax.random.uniform(k3, (HID_F, OUT_F), dtype, -bound2, bound2)
    b2 = jax.random.uniform(k4, (OUT_F,), dtype, -bound2, bound2)
    return w1, b1, w2, b2


if __name__ == "__main__":
    key = jax.random.PRNGKey(0)
    kp, kx, kb, kv = jax.random.split(key, 4)
    w1, b1, w2, b2 = init_params(kp)

    # Small batch given as [B, 3, 20] to exercise the flatten-to-60 path.
    # Force the Pallas path (fallback bypassed) so the kernel itself runs.
    x = jax.random.normal(kx, (8, 3, 20), jnp.float32)
    logits = gesture_forward(x, w1, b1, w2, b2, min_pallas_batch=0)
    logits = jax.block_until_ready(logits)

    x_flat = x.reshape(x.shape[0], -1)
    ref = jnp.maximum(x_flat @ w1 + b1, 0.0) @ w2 + b2
    assert logits.shape == (8, OUT_F)
    assert jnp.allclose(logits, ref, atol=1e-4, rtol=1e-4)

    # Multi-step grid + padding path: B not a multiple of the 2048-row tile.
    xb = jax.random.normal(kb, (4100, IN_F), jnp.float32)
    lb = jax.block_until_ready(
        gesture_forward(xb, w1, b1, w2, b2, min_pallas_batch=0))
    refb = jnp.maximum(xb @ w1 + b1, 0.0) @ w2 + b2
    assert lb.shape == (4100, OUT_F)
    assert jnp.allclose(lb, refb, atol=1e-4, rtol=1e-4)

    # 1-D input path: a single [60] vector returns an [8] vector (uses the
    # small-batch jnp fallback).
    xv = jax.random.normal(kv, (IN_F,), jnp.float32)
    lv = jax.block_until_ready(gesture_forward(xv, w1, b1, w2, b2))
    ref_v = jnp.maximum(xv @ w1 + b1, 0.0) @ w2 + b2
    assert lv.shape == (OUT_F,)
    assert jnp.allclose(lv, ref_v, atol=1e-4, rtol=1e-4)

    print("KERNEL_OK")
</pallas_src>

<mosaic_0001>
module attributes {stable_mosaic.version = 11 : i64} {
  func.func @_mlp_kernel(%arg0: i32, %arg1: memref<8x60xf32, #tpu.memory_space<vmem>>, %arg2: memref<60x30xf32, #tpu.memory_space<vmem>>, %arg3: memref<1x30xf32, #tpu.memory_space<vmem>>, %arg4: memref<30x8xf32, #tpu.memory_space<vmem>>, %arg5: memref<1x8xf32, #tpu.memory_space<vmem>>, %arg6: memref<8x8xf32, #tpu.memory_space<vmem>>) attributes {dimension_semantics = [#tpu.dimension_semantics<parallel>], iteration_bounds = array<i64: 1>, scalar_prefetch = 0 : i64, scratch_operands = 0 : i64, tpu.core_type = #tpu.core_type<tc>, window_params = [{transform_indices = @transform_0, window_bounds = array<i64: 8, 60>}, {pipeline_mode = #tpu.pipeline_mode<synchronous>, transform_indices = @transform_1, window_bounds = array<i64: 60, 30>}, {pipeline_mode = #tpu.pipeline_mode<synchronous>, transform_indices = @transform_2, window_bounds = array<i64: 1, 30>}, {pipeline_mode = #tpu.pipeline_mode<synchronous>, transform_indices = @transform_3, window_bounds = array<i64: 30, 8>}, {pipeline_mode = #tpu.pipeline_mode<synchronous>, transform_indices = @transform_4, window_bounds = array<i64: 1, 8>}, {transform_indices = @transform_5, window_bounds = array<i64: 8, 8>}]} {
    %c0 = arith.constant 0 : index
    %c0_0 = arith.constant 0 : index
    %0 = vector.load %arg1[%c0, %c0_0] : memref<8x60xf32, #tpu.memory_space<vmem>>, vector<8x60xf32>
    %c0_1 = arith.constant 0 : index
    %c0_2 = arith.constant 0 : index
    %1 = vector.load %arg2[%c0_1, %c0_2] : memref<60x30xf32, #tpu.memory_space<vmem>>, vector<60x30xf32>
    %cst = arith.constant dense<0.000000e+00> : vector<8x30xf32>
    %2 = tpu.matmul %0, %1, %cst {dimension_numbers = #tpu.dot_dimension_numbers<[1], [0], [0], [1], [0, 0, 1, 1], [], []>} : vector<8x60xf32>, vector<60x30xf32>, vector<8x30xf32> -> vector<8x30xf32>
    %c0_3 = arith.constant 0 : index
    %c0_4 = arith.constant 0 : index
    %3 = vector.load %arg3[%c0_3, %c0_4] : memref<1x30xf32, #tpu.memory_space<vmem>>, vector<1x30xf32>
    %4 = vector.broadcast %3 : vector<1x30xf32> to vector<8x30xf32>
    %5 = arith.addf %2, %4 : vector<8x30xf32>
    %cst_5 = arith.constant 0.000000e+00 : f32
    %6 = vector.broadcast %cst_5 : f32 to vector<8x30xf32>
    %7 = arith.maximumf %5, %6 : vector<8x30xf32>
    %c0_6 = arith.constant 0 : index
    %c0_7 = arith.constant 0 : index
    %8 = vector.load %arg4[%c0_6, %c0_7] : memref<30x8xf32, #tpu.memory_space<vmem>>, vector<30x8xf32>
    %cst_8 = arith.constant dense<0.000000e+00> : vector<8x8xf32>
    %9 = tpu.matmul %7, %8, %cst_8 {dimension_numbers = #tpu.dot_dimension_numbers<[1], [0], [0], [1], [0, 0, 1, 1], [], []>} : vector<8x30xf32>, vector<30x8xf32>, vector<8x8xf32> -> vector<8x8xf32>
    %c0_9 = arith.constant 0 : index
    %c0_10 = arith.constant 0 : index
    %10 = vector.load %arg5[%c0_9, %c0_10] : memref<1x8xf32, #tpu.memory_space<vmem>>, vector<1x8xf32>
    %11 = vector.broadcast %10 : vector<1x8xf32> to vector<8x8xf32>
    %12 = arith.addf %9, %11 : vector<8x8xf32>
    %c0_11 = arith.constant 0 : index
    %c0_12 = arith.constant 0 : index
    %13 = vector.load %arg6[%c0_11, %c0_12] : memref<8x8xf32, #tpu.memory_space<vmem>>, vector<8x8xf32>
    tpu.vector_store %arg6[%c0_11, %c0_12], %12 {strides = array<i32>} : memref<8x8xf32, #tpu.memory_space<vmem>>, vector<8x8xf32>,
    return
  }
  func.func @transform_0(%arg0: i32) -> (i32, i32) {
    %c0_i32 = arith.constant 0 : i32
    %c0_i32_0 = arith.constant 0 : i32
    return %arg0, %c0_i32 : i32, i32
  }
  func.func @transform_1(%arg0: i32) -> (i32, i32) {
    %c0_i32 = arith.constant 0 : i32
    %c0_i32_0 = arith.constant 0 : i32
    %c0_i32_1 = arith.constant 0 : i32
    return %c0_i32, %c0_i32_0 : i32, i32
  }
  func.func @transform_2(%arg0: i32) -> (i32, i32) {
    %c0_i32 = arith.constant 0 : i32
    %c0_i32_0 = arith.constant 0 : i32
    %c0_i32_1 = arith.constant 0 : i32
    return %c0_i32, %c0_i32_0 : i32, i32
  }
  func.func @transform_3(%arg0: i32) -> (i32, i32) {
    %c0_i32 = arith.constant 0 : i32
    %c0_i32_0 = arith.constant 0 : i32
    %c0_i32_1 = arith.constant 0 : i32
    return %c0_i32, %c0_i32_0 : i32, i32
  }
  func.func @transform_4(%arg0: i32) -> (i32, i32) {
    %c0_i32 = arith.constant 0 : i32
    %c0_i32_0 = arith.constant 0 : i32
    %c0_i32_1 = arith.constant 0 : i32
    return %c0_i32, %c0_i32_0 : i32, i32
  }
  func.func @transform_5(%arg0: i32) -> (i32, i32) {
    %c0_i32 = arith.constant 0 : i32
    %c0_i32_0 = arith.constant 0 : i32
    return %arg0, %c0_i32 : i32, i32
  }
}

</mosaic_0001>

<llo_original>
// kernel: tpu_custom_call.1
$region0: #{tpu_custom_call.1}
  #allocation0 [shape = 'u32[]', space=smem, size = 0x4, offset = 0x4, fixed_abs, tag = 'smem constant byte address 0x4 - core index']
  #allocation1 [shape = 'u32[144,128]{1,0:T(1,128)}', space=vmem, size = 0x12000, scoped, tag = 'internal scratch']
  %s0 = inlined_call_operand.vmem [shape: f32[8,60], index: 0, kind: input, shape index: {}]
  %s1 = inlined_call_operand.vmem [shape: f32[60,30], index: 1, kind: input, shape index: {}]
  %s2 = inlined_call_operand.vmem [shape: f32[1,30], index: 2, kind: input, shape index: {}]
  %s3 = inlined_call_operand.vmem [shape: f32[30,8], index: 3, kind: input, shape index: {}]
  %s4 = inlined_call_operand.vmem [shape: f32[1,8], index: 4, kind: input, shape index: {}]
  %s5 = inlined_call_operand.hbm [shape: f32[8,8], index: 5, kind: output, shape index: {}]
  %s6 = sld [smem:[#allocation0]]
  $region30: #{tpu_custom_call.1} parent=0
    _
  %s8 = ssub.s32 1, %s6
  %s9 = scalar_select 0, %s8, %s6
  $region1: #{tpu_custom_call.1} parent=0
    #allocation2 [shape = 'u8[4096]{0}', space=vmem, size = 0x1000, scoped, tag = 'output window, operand 0, single buffered']
    #allocation3 [shape = 's32[1]{0}', space=sflag, size = 0x4, scoped, tag = 'scoped memory for tpu_custom_call.1']
    %10 = vsyncpa [#allocation3], 0
    // Predicated region
    $region2: #{tpu_custom_call.1} parent=1 // pred_check
      _
    $region3: #{tpu_custom_call.1} parent=1 // pred_check_branch
      %12 = sbr.rel (0) target = $region5
    $region4: #{tpu_custom_call.1} parent=1 // pred_region
      _
    $region5: #{tpu_custom_call.1} parent=1 // pred_fallthru
      _
    // Predicated region
    $region6: #{tpu_custom_call.1} parent=1 // pred_check
      _
    $region7: #{tpu_custom_call.1} parent=1 // pred_check_branch
      %14 = sbr.rel (0) target = $region9
    $region8: #{tpu_custom_call.1} parent=1 // pred_region
      _
    $region9: #{tpu_custom_call.1} parent=1 // pred_fallthru
      _
    // Predicated region
    $region10: #{tpu_custom_call.1} parent=1 // pred_check
      _
    $region11: #{tpu_custom_call.1} parent=1 // pred_check_branch
      %16 = sbr.rel (0) target = $region13
    $region12: #{tpu_custom_call.1} parent=1 // pred_region
      _
    $region13: #{tpu_custom_call.1} parent=1 // pred_fallthru
      _
    // Predicated region
    $region14: #{tpu_custom_call.1} parent=1 // pred_check
      _
    $region15: #{tpu_custom_call.1} parent=1 // pred_check_branch
      %18 = sbr.rel (0) target = $region17
    $region16: #{tpu_custom_call.1} parent=1 // pred_region
      _
    $region17: #{tpu_custom_call.1} parent=1 // pred_fallthru
      _
    // Predicated region
    $region18: #{tpu_custom_call.1} parent=1 // pred_check
      _
    $region19: #{tpu_custom_call.1} parent=1 // pred_check_branch
      %20 = sbr.rel (0) target = $region21
    $region20: #{tpu_custom_call.1} parent=1 // pred_region
      _
    $region21: #{tpu_custom_call.1} parent=1 // pred_fallthru
      _
    %v21 = vld [vmem:[%s0] sm:$0xff]
    %v22 = vld [vmem:[%s1] sm:$0xff]
    %v23 = vld [vmem:[%s1 + $0x8] sm:$0xff]
    %v24 = vld [vmem:[%s1 + $0x10] sm:$0xff]
    %v25 = vld [vmem:[%s1 + $0x18] sm:$0xff]
    %v26 = vld [vmem:[%s1 + $0x20] sm:$0xff]
    %v27 = vld [vmem:[%s1 + $0x28] sm:$0xff]
    %v28 = vld [vmem:[%s1 + $0x30] sm:$0xff]
    %v29 = vld [vmem:[%s1 + $0x38] sm:$0xf]
    %v30 = vld [vmem:[%s2] sm:$0x1]
    %v32 = vlaneseq
    %v33 = vshrl.u32 %v32, 7
    %v34 = vsub.s32 0, %v33
    %v35 = vrot.slane %v30, %v34
    %vm37 = vcmask 490496
    %v39 = vsel %vm37, %v21, 0
    %vm41 = vcmask 1043456
    %v43 = vsel %vm41, %v29, 0
    %45 = vmatprep.subr.mxu0 0.0
    %46 = vmatpush1.msra.mxu0 0.0
    %47 = vmatprep.subr.mxu0 0.0
    %48 = vmatpush1.msra.mxu0 0.0
    %49 = vmatprep.subr.mxu0 0.0
    %50 = vmatpush1.msra.mxu0 0.0
    %51 = vmatprep.subr.mxu0 0.0
    %52 = vmatpush1.msra.mxu0 0.0
    %53 = vmatprep.subr.mxu0 0.0
    %54 = vmatpush1.msra.mxu0 0.0
    %55 = vmatprep.subr.mxu0 0.0
    %56 = vmatpush1.msra.mxu0 0.0
    %57 = vmatprep.subr.mxu0 0.0
    %58 = vmatpush1.msra.mxu0 0.0
    %59 = vmatprep.subr.mxu0 0.0
    %60 = vmatpush1.msra.mxu0 0.0
    %61 = vmatprep.subr.mxu0 0.0
    %62 = vmatpush1.msra.mxu0 %v43
    %63 = vmatprep.subr.mxu0 0.0
    %64 = vmatpush1.msra.mxu0 %v28
    %65 = vmatprep.subr.mxu0 0.0
    %66 = vmatpush1.msra.mxu0 %v27
    %67 = vmatprep.subr.mxu0 0.0
    %68 = vmatpush1.msra.mxu0 %v26
    %69 = vmatprep.subr.mxu0 0.0
    %70 = vmatpush1.msra.mxu0 %v25
    %71 = vmatprep.subr.mxu0 0.0
    %72 = vmatpush1.msra.mxu0 %v24
    %73 = vmatprep.subr.mxu0 0.0
    %74 = vmatpush1.msra.mxu0 %v23
    %75 = vmatprep.subr.mxu0 0.0
    %76 = vmatpush1.msra.mxu0 %v22
    %77 = vmatprep.subr.mxu0 0.0
    %78 = vmatpush2.msra.mxu0 0.0
    %79 = vmatprep.subr.mxu0 0.0
    %80 = vmatpush2.msra.mxu0 0.0
    %81 = vmatprep.subr.mxu0 0.0
    %82 = vmatpush2.msra.mxu0 0.0
    %83 = vmatprep.subr.mxu0 0.0
    %84 = vmatpush2.msra.mxu0 0.0
    %85 = vmatprep.subr.mxu0 0.0
    %86 = vmatpush2.msra.mxu0 0.0
    %87 = vmatprep.subr.mxu0 0.0
    %88 = vmatpush2.msra.mxu0 0.0
    %89 = vmatprep.subr.mxu0 0.0
    %90 = vmatpush2.msra.mxu0 0.0
    %91 = vmatprep.subr.mxu0 0.0
    %92 = vmatpush2.msra.mxu0 0.0
    %93 = vmatprep.subr.mxu0 0.0
    %94 = vmatpush2.msra.mxu0 0.0
    %95 = vmatprep.subr.mxu0 0.0
    %96 = vmatpush2.msra.mxu0 0.0
    %97 = vmatprep.subr.mxu0 0.0
    %98 = vmatpush2.msra.mxu0 0.0
    %99 = vmatprep.subr.mxu0 0.0
    %100 = vmatpush2.msra.mxu0 0.0
    %101 = vmatprep.subr.mxu0 0.0
    %102 = vmatpush2.msra.mxu0 0.0
    %103 = vmatprep.subr.mxu0 0.0
    %104 = vmatpush2.msra.mxu0 0.0
    %105 = vmatprep.subr.mxu0 0.0
    %106 = vmatpush2.msra.mxu0 0.0
    %107 = vmatprep.subr.mxu0 0.0
    %108 = vmatpush2.msra.mxu0 0.0
    %109 = vmatprep.mubr.f32.mxu0 0.0
    %110 = vmatmul.mubr.f32.gmra.mxu0 %v39
    %v111 = vpop.f32.mrf.mxu0
    %v112 = vadd.f32 %v35, %v111
    %v113 = vpop.f32.mrf.mxu0
    %114 = vdwg.mxu0
    %v115 = vmax.f32 %v112, 0.0
    %v116 = vld [vmem:[%s3] sm:$0xff]
    %v117 = vld [vmem:[%s3 + $0x8] sm:$0xff]
    %v118 = vld [vmem:[%s3 + $0x10] sm:$0xff]
    %v119 = vld [vmem:[%s3 + $0x18] sm:$0x3f]
    %v120 = vld [vmem:[%s4] sm:$0x1]
    %v122 = vlaneseq
    %v123 = vshrl.u32 %v122, 7
    %v124 = vsub.s32 0, %v123
    %v125 = vrot.slane %v120, %v124
    %vm127 = vcmask 244736
    %v129 = vsel %vm127, %v115, 0
    %vm131 = vcmask 1045504
    %v133 = vsel %vm131, %v119, 0
    %135 = vmatprep.subr.mxu0 0.0
    %136 = vmatpush1.msra.mxu0 0.0
    %137 = vmatprep.subr.mxu0 0.0
    %138 = vmatpush1.msra.mxu0 0.0
    %139 = vmatprep.subr.mxu0 0.0
    %140 = vmatpush1.msra.mxu0 0.0
    %141 = vmatprep.subr.mxu0 0.0
    %142 = vmatpush1.msra.mxu0 0.0
    %143 = vmatprep.subr.mxu0 0.0
    %144 = vmatpush1.msra.mxu0 0.0
    %145 = vmatprep.subr.mxu0 0.0
    %146 = vmatpush1.msra.mxu0 0.0
    %147 = vmatprep.subr.mxu0 0.0
    %148 = vmatpush1.msra.mxu0 0.0
    %149 = vmatprep.subr.mxu0 0.0
    %150 = vmatpush1.msra.mxu0 0.0
    %151 = vmatprep.subr.mxu0 0.0
    %152 = vmatpush1.msra.mxu0 0.0
    %153 = vmatprep.subr.mxu0 0.0
    %154 = vmatpush1.msra.mxu0 0.0
    %155 = vmatprep.subr.mxu0 0.0
    %156 = vmatpush1.msra.mxu0 0.0
    %157 = vmatprep.subr.mxu0 0.0
    %158 = vmatpush1.msra.mxu0 0.0
    %159 = vmatprep.subr.mxu0 0.0
    %160 = vmatpush1.msra.mxu0 %v133
    %161 = vmatprep.subr.mxu0 0.0
    %162 = vmatpush1.msra.mxu0 %v118
    %163 = vmatprep.subr.mxu0 0.0
    %164 = vmatpush1.msra.mxu0 %v117
    %165 = vmatprep.subr.mxu0 0.0
    %166 = vmatpush1.msra.mxu0 %v116
    %167 = vmatprep.subr.mxu0 0.0
    %168 = vmatpush2.msra.mxu0 0.0
    %169 = vmatprep.subr.mxu0 0.0
    %170 = vmatpush2.msra.mxu0 0.0
    %171 = vmatprep.subr.mxu0 0.0
    %172 = vmatpush2.msra.mxu0 0.0
    %173 = vmatprep.subr.mxu0 0.0
    %174 = vmatpush2.msra.mxu0 0.0
    %175 = vmatprep.subr.mxu0 0.0
    %176 = vmatpush2.msra.mxu0 0.0
    %177 = vmatprep.subr.mxu0 0.0
    %178 = vmatpush2.msra.mxu0 0.0
    %179 = vmatprep.subr.mxu0 0.0
    %180 = vmatpush2.msra.mxu0 0.0
    %181 = vmatprep.subr.mxu0 0.0
    %182 = vmatpush2.msra.mxu0 0.0
    %183 = vmatprep.subr.mxu0 0.0
    %184 = vmatpush2.msra.mxu0 0.0
    %185 = vmatprep.subr.mxu0 0.0
    %186 = vmatpush2.msra.mxu0 0.0
    %187 = vmatprep.subr.mxu0 0.0
    %188 = vmatpush2.msra.mxu0 0.0
    %189 = vmatprep.subr.mxu0 0.0
    %190 = vmatpush2.msra.mxu0 0.0
    %191 = vmatprep.subr.mxu0 0.0
    %192 = vmatpush2.msra.mxu0 0.0
    %193 = vmatprep.subr.mxu0 0.0
    %194 = vmatpush2.msra.mxu0 0.0
    %195 = vmatprep.subr.mxu0 0.0
    %196 = vmatpush2.msra.mxu0 0.0
    %197 = vmatprep.subr.mxu0 0.0
    %198 = vmatpush2.msra.mxu0 0.0
    %199 = vmatprep.mubr.f32.mxu0 0.0
    %200 = vmatmul.mubr.f32.gmra.mxu0 %v129
    %v201 = vpop.f32.mrf.mxu0
    %v202 = vadd.f32 %v125, %v201
    %v203 = vpop.f32.mrf.mxu0
    %204 = vdwg.mxu0
    %vm205 = vcmask 64512
    %206 = vst.msk [vmem:[#allocation2] sm:$0xff] %vm205, %v202
    // Predicated region
    $region22: #{tpu_custom_call.1} parent=1 // pred_check
      _
    $region23: #{tpu_custom_call.1} parent=1 // pred_check_branch
      %208 = sbr.rel (0) target = $region25
    $region24: #{tpu_custom_call.1} parent=1 // pred_region
      %s210 = ssub.s32 128, 128
      %211 = vsyncadd [#allocation3], %s210
      %s213 = sshll.u32 [#allocation2], 4
      %s214 = int_to_ptr.vmem [resolvable:$true] %s213
      %216 = dma.vmem_to_hbm [thread:$0]  %s214, 128, %s5, [#allocation3]
    $region25: #{tpu_custom_call.1} parent=1 // pred_fallthru
      _
    // Predicated region
    $region26: #{tpu_custom_call.1} parent=1 // pred_check
      _
    $region27: #{tpu_custom_call.1} parent=1 // pred_check_branch
      %218 = sbr.rel (0) target = $region29
    $region28: #{tpu_custom_call.1} parent=1 // pred_region
      %219 = dma.done [#allocation3], 128
    $region29: #{tpu_custom_call.1} parent=1 // pred_fallthru
      _
    %220 = vsyncpa [#allocation3], 1

</llo_original>
